<compile_context>
chip_gen: v7x
topology: tpu7x:2x2x1
jax: 0.10.0
libtpu: 0.0.40
codegen_flags: <defaults>
</compile_context>

<pallas_src>
import functools

import jax
import jax.numpy as jnp
from jax.experimental import pallas as pl
from jax.experimental.pallas import tpu as pltpu

_MiB = 1024 * 1024


def _round_up(x: int, m: int) -> int:
    return ((x + m - 1) // m) * m


def _pick_tile(full: int, cap: int, align: int) -> int:
    """Largest `align`-multiple tile <= cap that divides `full`; `full` if it fits."""
    if full <= cap:
        return full
    t = (cap // align) * align
    while t >= align:
        if full % t == 0:
            return t
        t -= align
    return full  # no aligned divisor -> single full-extent block (still correct)


def _vmem_cap_bytes() -> int:
    """Per-core VMEM budget (leave headroom for the compiler's own scratch)."""
    try:
        cap = int(pltpu.get_tpu_info().vmem_capacity_bytes)
    except Exception:
        cap = 64 * _MiB  # conservative default (v7x per-TC)
    return min(int(0.875 * cap), 112 * _MiB)


# ---------------------------------------------------------------------------
# Kernels
# ---------------------------------------------------------------------------
def _linear_kernel_single_k(x_ref, w_ref, b_ref, o_ref):
    """Whole K in one tile: plain matmul + bias epilogue, no accumulator."""
    acc = jnp.dot(x_ref[...], w_ref[...], preferred_element_type=jnp.float32)
    o_ref[...] = (acc + b_ref[...]).astype(o_ref.dtype)


def _linear_kernel_multi_k_f32out(x_ref, w_ref, b_ref, o_ref):
    """K tiled, f32 output: accumulate directly into the K-resident output block."""
    @pl.when(pl.program_id(2) == 0)
    def _init():
        o_ref[...] = jnp.broadcast_to(b_ref[...], o_ref.shape).astype(o_ref.dtype)

    o_ref[...] += jnp.dot(x_ref[...], w_ref[...], preferred_element_type=jnp.float32)


def _linear_kernel_multi_k_acc(x_ref, w_ref, b_ref, o_ref, acc_ref):
    """K tiled, non-f32 output: f32 scratch accumulator + cast epilogue."""
    k = pl.program_id(2)

    @pl.when(k == 0)
    def _init():
        acc_ref[...] = jnp.zeros_like(acc_ref)

    acc_ref[...] += jnp.dot(x_ref[...], w_ref[...], preferred_element_type=jnp.float32)

    @pl.when(k == pl.num_programs(2) - 1)
    def _epilogue():
        o_ref[...] = (acc_ref[...] + b_ref[...]).astype(o_ref.dtype)


# ---------------------------------------------------------------------------
# Parameter prep (one-time) and forward
# ---------------------------------------------------------------------------
def prepare_linear_params(w_t, b, *, use_bf16_inputs=False, tn_cap=512, tk_cap=None):
    """One-time padding/cast of the (static) weight and bias.

    w_t: [D_in, D_out]  (transposed torch weight)
    b:   [D_out] or [1, D_out]
    Returns (w_p, b_p) ready for linear_net_forward.
    """
    D_in, D_out = w_t.shape
    if tk_cap is None:
        tk_cap = 2048 if use_bf16_inputs else 1024
    in_dtype = jnp.bfloat16 if use_bf16_inputs else w_t.dtype

    # Pad only if the dimension has to be tiled (tiles must then be 128-aligned);
    # a single full-extent block needs no alignment and no padding at all.
    K_p = D_in if D_in <= tk_cap else _round_up(D_in, 128)
    N_p = D_out if D_out <= tn_cap else _round_up(D_out, 128)

    w_p = w_t
    if (K_p, N_p) != (D_in, D_out):
        w_p = jnp.pad(w_t, ((0, K_p - D_in), (0, N_p - D_out)))
    w_p = w_p.astype(in_dtype)

    b_p = jnp.asarray(b, jnp.float32).reshape(1, D_out)
    if N_p != D_out:
        b_p = jnp.pad(b_p, ((0, 0), (0, N_p - D_out)))
    return w_p, b_p


@functools.partial(jax.jit, static_argnames=("d_out", "tm_cap", "tn_cap", "tk_cap"))
def linear_net_forward(x, w_p, b_p, *, d_out, tm_cap=512, tn_cap=512, tk_cap=2048):
    """Pallas equivalent of LinearNet.forward.

    x:   [B, D_in]  activations (f32)
    w_p: [K_p, N_p] pre-padded / pre-cast weight from prepare_linear_params
    b_p: [1, N_p]   pre-padded f32 bias
    Returns [B, d_out] in x.dtype.
    """
    B, D_in = x.shape
    K_p, N_p = w_p.shape
    assert K_p >= D_in and N_p >= d_out

    out_dtype = x.dtype
    in_dtype = w_p.dtype
    in_bytes = jnp.dtype(in_dtype).itemsize
    out_bytes = jnp.dtype(out_dtype).itemsize
    tk_cap_eff = tk_cap if in_dtype == jnp.bfloat16 else min(tk_cap, 1024)

    # ---- tile planning (all static) ----
    if B <= tm_cap:
        tm, B_p = B, B
    else:
        B_p = _round_up(B, 8)
        tm = _pick_tile(B_p, tm_cap, 8)
    tn = _pick_tile(N_p, tn_cap, 128)
    tk = _pick_tile(K_p, tk_cap_eff, 128)

    # Guarantee >=2 (M,N) blocks for v7x's two TensorCores when it's worth it.
    if (B_p // tm) * (N_p // tn) == 1:
        if N_p >= 512 and N_p % 256 == 0:
            tn = N_p // 2
        elif B_p >= 256 and B_p % 16 == 0:
            tm = B_p // 2

    multi_k = tk < K_p
    grid_m, grid_n = B_p // tm, N_p // tn

    # ---- per-call x cast/pad only when actually needed ----
    if x.dtype != in_dtype:
        x = x.astype(in_dtype)
    if (B_p != B) or (K_p != D_in):
        x = jnp.pad(x, ((0, B_p - B), (0, K_p - D_in)))

    # ---- VMEM budget ----
    vmem_est = (
        2 * (tm * tk + tk * tn) * in_bytes  # double-buffered x / w tiles
        + 2 * tn * 4                        # bias tile
        + 2 * tm * tn * out_bytes           # output tile
    )
    if multi_k and out_dtype != jnp.float32:
        vmem_est += tm * tn * 4             # f32 accumulator scratch
    vmem_limit = int(min(_vmem_cap_bytes(), max(32 * _MiB, 2 * vmem_est)))

    cost = pl.CostEstimate(
        flops=2 * B_p * K_p * N_p,
        transcendentals=0,
        bytes_accessed=(B_p * K_p + K_p * N_p) * in_bytes
        + N_p * 4
        + B_p * N_p * out_bytes,
    )

    # ---- grid / kernel selection ----
    if not multi_k:
        kernel = _linear_kernel_single_k
        grid = (grid_m, grid_n)
        dims = ("parallel", "parallel")
        in_specs = [
            pl.BlockSpec((tm, tk), lambda i, j: (i, 0)),
            pl.BlockSpec((tk, tn), lambda i, j: (0, j)),
            pl.BlockSpec((1, tn), lambda i, j: (0, j)),
        ]
        out_specs = pl.BlockSpec((tm, tn), lambda i, j: (i, j))
        scratch = []
    else:
        grid = (grid_m, grid_n, K_p // tk)
        dims = ("parallel", "parallel", "arbitrary")
        in_specs = [
            pl.BlockSpec((tm, tk), lambda i, j, k: (i, k)),
            pl.BlockSpec((tk, tn), lambda i, j, k: (k, j)),
            pl.BlockSpec((1, tn), lambda i, j, k: (0, j)),  # K-resident bias
        ]
        out_specs = pl.BlockSpec((tm, tn), lambda i, j, k: (i, j))  # K-resident
        if out_dtype == jnp.float32:
            kernel = _linear_kernel_multi_k_f32out
            scratch = []
        else:
            kernel = _linear_kernel_multi_k_acc
            scratch = [pltpu.VMEM((tm, tn), jnp.float32)]

    out = pl.pallas_call(
        kernel,
        out_shape=jax.ShapeDtypeStruct((B_p, N_p), out_dtype),
        grid_spec=pltpu.PrefetchScalarGridSpec(
            num_scalar_prefetch=0,
            grid=grid,
            in_specs=in_specs,
            out_specs=out_specs,
            scratch_shapes=scratch,
        ),
        compiler_params=pltpu.CompilerParams(
            dimension_semantics=dims,
            vmem_limit_bytes=vmem_limit,
        ),
        cost_estimate=cost,
    )(x, w_p, b_p)

    if (B_p != B) or (N_p != d_out):
        out = out[:B, :d_out]
    return out


def init_linear_params(key, input_dimensions, output_dimensions):
    """Deterministic init mirroring torch.nn.Linear's default (uniform +/-1/sqrt(fan_in))."""
    k_w, k_b = jax.random.split(key)
    bound = 1.0 / jnp.sqrt(jnp.float32(input_dimensions))
    # torch stores weight as [out, in]; keep it transposed to [in, out].
    w_t = jax.random.uniform(
        k_w, (input_dimensions, output_dimensions),
        dtype=jnp.float32, minval=-bound, maxval=bound)
    b = jax.random.uniform(
        k_b, (1, output_dimensions),
        dtype=jnp.float32, minval=-bound, maxval=bound)
    return w_t, b


if __name__ == "__main__":
    key = jax.random.PRNGKey(0)
    k_x, k_p = jax.random.split(key)

    # --- demo shape from the module (tiny; no padding, single (1,1) grid) ----
    batch, d_in, d_out = 8, 32, 16
    x = jax.random.normal(k_x, (batch, d_in), dtype=jnp.float32)
    w_t, b = init_linear_params(k_p, d_in, d_out)
    w_p, b_p = prepare_linear_params(w_t, b)

    out = jax.block_until_ready(linear_net_forward(x, w_p, b_p, d_out=d_out))
    ref = x @ w_t + b
    assert out.shape == (batch, d_out)
    assert jnp.allclose(out, ref, atol=1e-5, rtol=1e-5)

    # --- larger non-aligned shape, bf16 MXU inputs, megacore M split ---------
    k_x2, k_p2 = jax.random.split(jax.random.PRNGKey(1))
    B2, Din2, Dout2 = 384, 640, 272
    x2 = jax.random.normal(k_x2, (B2, Din2), dtype=jnp.float32)
    w2, b2 = init_linear_params(k_p2, Din2, Dout2)
    w2_p, b2_p = prepare_linear_params(w2, b2, use_bf16_inputs=True)

    out2 = jax.block_until_ready(linear_net_forward(x2, w2_p, b2_p, d_out=Dout2))
    ref2 = x2 @ w2 + b2
    assert out2.shape == (B2, Dout2)
    assert jnp.allclose(out2, ref2, atol=5e-2, rtol=5e-2)

    # --- deep K: exercises the tiled-K path with direct-into-output accum ----
    k_x3, k_p3 = jax.random.split(jax.random.PRNGKey(2))
    B3, Din3, Dout3 = 256, 2560, 384
    x3 = jax.random.normal(k_x3, (B3, Din3), dtype=jnp.float32)
    w3, b3 = init_linear_params(k_p3, Din3, Dout3)
    w3_p, b3_p = prepare_linear_params(w3, b3, use_bf16_inputs=True)

    out3 = jax.block_until_ready(linear_net_forward(x3, w3_p, b3_p, d_out=Dout3))
    ref3 = x3 @ w3 + b3
    assert out3.shape == (B3, Dout3)
    assert jnp.allclose(out3, ref3, atol=5e-2, rtol=5e-2)

    print("KERNEL_OK")
</pallas_src>

<mosaic_0001>
module attributes {stable_mosaic.version = 11 : i64} {
  func.func @_linear_kernel_single_k(%arg0: i32, %arg1: i32, %arg2: memref<8x32xf32, #tpu.memory_space<vmem>>, %arg3: memref<32x16xf32, #tpu.memory_space<vmem>>, %arg4: memref<1x16xf32, #tpu.memory_space<vmem>>, %arg5: memref<8x16xf32, #tpu.memory_space<vmem>>) attributes {dimension_semantics = [#tpu.dimension_semantics<parallel>, #tpu.dimension_semantics<parallel>], iteration_bounds = array<i64: 1, 1>, scalar_prefetch = 0 : i64, scratch_operands = 0 : i64, tpu.core_type = #tpu.core_type<tc>, window_params = [{transform_indices = @transform_0, window_bounds = array<i64: 8, 32>}, {transform_indices = @transform_1, window_bounds = array<i64: 32, 16>}, {transform_indices = @transform_2, window_bounds = array<i64: 1, 16>}, {transform_indices = @transform_3, window_bounds = array<i64: 8, 16>}]} {
    %c0 = arith.constant 0 : index
    %c0_0 = arith.constant 0 : index
    %0 = vector.load %arg2[%c0, %c0_0] : memref<8x32xf32, #tpu.memory_space<vmem>>, vector<8x32xf32>
    %c0_1 = arith.constant 0 : index
    %c0_2 = arith.constant 0 : index
    %1 = vector.load %arg3[%c0_1, %c0_2] : memref<32x16xf32, #tpu.memory_space<vmem>>, vector<32x16xf32>
    %cst = arith.constant dense<0.000000e+00> : vector<8x16xf32>
    %2 = tpu.matmul %0, %1, %cst {dimension_numbers = #tpu.dot_dimension_numbers<[1], [0], [0], [1], [0, 0, 1, 1], [], []>} : vector<8x32xf32>, vector<32x16xf32>, vector<8x16xf32> -> vector<8x16xf32>
    %c0_3 = arith.constant 0 : index
    %c0_4 = arith.constant 0 : index
    %3 = vector.load %arg4[%c0_3, %c0_4] : memref<1x16xf32, #tpu.memory_space<vmem>>, vector<1x16xf32>
    %4 = vector.broadcast %3 : vector<1x16xf32> to vector<8x16xf32>
    %5 = arith.addf %2, %4 : vector<8x16xf32>
    %c0_5 = arith.constant 0 : index
    %c0_6 = arith.constant 0 : index
    %6 = vector.load %arg5[%c0_5, %c0_6] : memref<8x16xf32, #tpu.memory_space<vmem>>, vector<8x16xf32>
    tpu.vector_store %arg5[%c0_5, %c0_6], %5 {strides = array<i32>} : memref<8x16xf32, #tpu.memory_space<vmem>>, vector<8x16xf32>,
    return
  }
  func.func @transform_0(%arg0: i32, %arg1: i32) -> (i32, i32) {
    %c0_i32 = arith.constant 0 : i32
    %c0_i32_0 = arith.constant 0 : i32
    return %arg0, %c0_i32 : i32, i32
  }
  func.func @transform_1(%arg0: i32, %arg1: i32) -> (i32, i32) {
    %c0_i32 = arith.constant 0 : i32
    %c0_i32_0 = arith.constant 0 : i32
    return %c0_i32, %arg1 : i32, i32
  }
  func.func @transform_2(%arg0: i32, %arg1: i32) -> (i32, i32) {
    %c0_i32 = arith.constant 0 : i32
    %c0_i32_0 = arith.constant 0 : i32
    return %c0_i32, %arg1 : i32, i32
  }
  func.func @transform_3(%arg0: i32, %arg1: i32) -> (i32, i32) {
    %c0_i32 = arith.constant 0 : i32
    return %arg0, %arg1 : i32, i32
  }
}

</mosaic_0001>

<llo_original>
// kernel: linear_net_forward.1
$region0: #{linear_net_forward.1}
  #allocation0 [shape = 'u32[]', space=smem, size = 0x4, offset = 0x4, fixed_abs, tag = 'smem constant byte address 0x4 - core index']
  #allocation1 [shape = 'u32[144,128]{1,0:T(1,128)}', space=vmem, size = 0x12000, scoped, tag = 'internal scratch']
  %s0 = inlined_call_operand.vmem [shape: f32[8,32], index: 0, kind: input, shape index: {}]
  %s1 = inlined_call_operand.vmem [shape: f32[32,16], index: 1, kind: input, shape index: {}]
  %s2 = inlined_call_operand.vmem [shape: f32[1,16], index: 2, kind: input, shape index: {}]
  %s3 = inlined_call_operand.hbm [shape: f32[8,16], index: 3, kind: output, shape index: {}]
  %s4 = sld [smem:[#allocation0]]
  $region22: #{linear_net_forward.1} parent=0
    _
  %s6 = ssub.s32 1, %s4
  %s7 = scalar_select 0, %s6, %s4
  $region1: #{linear_net_forward.1} parent=0
    #allocation2 [shape = 'u8[4096]{0}', space=vmem, size = 0x1000, scoped, tag = 'output window, operand 0, single buffered']
    #allocation3 [shape = 's32[1]{0}', space=sflag, size = 0x4, scoped, tag = 'scoped memory for linear_net_forward.1']
    %8 = vsyncpa [#allocation3], 0
    // Predicated region
    $region2: #{linear_net_forward.1} parent=1 // pred_check
      _
    $region3: #{linear_net_forward.1} parent=1 // pred_check_branch
      %10 = sbr.rel (0) target = $region5
    $region4: #{linear_net_forward.1} parent=1 // pred_region
      _
    $region5: #{linear_net_forward.1} parent=1 // pred_fallthru
      _
    // Predicated region
    $region6: #{linear_net_forward.1} parent=1 // pred_check
      _
    $region7: #{linear_net_forward.1} parent=1 // pred_check_branch
      %12 = sbr.rel (0) target = $region9
    $region8: #{linear_net_forward.1} parent=1 // pred_region
      _
    $region9: #{linear_net_forward.1} parent=1 // pred_fallthru
      _
    // Predicated region
    $region10: #{linear_net_forward.1} parent=1 // pred_check
      _
    $region11: #{linear_net_forward.1} parent=1 // pred_check_branch
      %14 = sbr.rel (0) target = $region13
    $region12: #{linear_net_forward.1} parent=1 // pred_region
      _
    $region13: #{linear_net_forward.1} parent=1 // pred_fallthru
      _
    %v15 = vld [vmem:[%s0] sm:$0xff]
    %v16 = vld [vmem:[%s1] sm:$0xff]
    %v17 = vld [vmem:[%s1 + $0x8] sm:$0xff]
    %v18 = vld [vmem:[%s1 + $0x10] sm:$0xff]
    %v19 = vld [vmem:[%s1 + $0x18] sm:$0xff]
    %v20 = vld [vmem:[%s2] sm:$0x1]
    %v22 = vlaneseq
    %v23 = vshrl.u32 %v22, 7
    %v24 = vsub.s32 0, %v23
    %v25 = vrot.slane %v20, %v24
    %vm27 = vcmask 261120
    %v29 = vsel %vm27, %v15, 0
    %31 = vmatprep.subr.mxu0 0.0
    %32 = vmatpush1.msra.mxu0 %v16
    %33 = vmatprep.subr.mxu0 0.0
    %34 = vmatpush1.msra.mxu0 %v17
    %35 = vmatprep.subr.mxu0 0.0
    %36 = vmatpush1.msra.mxu0 %v18
    %37 = vmatprep.subr.mxu0 0.0
    %38 = vmatpush1.msra.mxu0 %v19
    %39 = vmatprep.subr.mxu0 0.0
    %40 = vmatpush1.msra.mxu0 0.0
    %41 = vmatprep.subr.mxu0 0.0
    %42 = vmatpush1.msra.mxu0 0.0
    %43 = vmatprep.subr.mxu0 0.0
    %44 = vmatpush1.msra.mxu0 0.0
    %45 = vmatprep.subr.mxu0 0.0
    %46 = vmatpush1.msra.mxu0 0.0
    %47 = vmatprep.subr.mxu0 0.0
    %48 = vmatpush1.msra.mxu0 0.0
    %49 = vmatprep.subr.mxu0 0.0
    %50 = vmatpush1.msra.mxu0 0.0
    %51 = vmatprep.subr.mxu0 0.0
    %52 = vmatpush1.msra.mxu0 0.0
    %53 = vmatprep.subr.mxu0 0.0
    %54 = vmatpush1.msra.mxu0 0.0
    %55 = vmatprep.subr.mxu0 0.0
    %56 = vmatpush1.msra.mxu0 0.0
    %57 = vmatprep.subr.mxu0 0.0
    %58 = vmatpush1.msra.mxu0 0.0
    %59 = vmatprep.subr.mxu0 0.0
    %60 = vmatpush1.msra.mxu0 0.0
    %61 = vmatprep.subr.mxu0 0.0
    %62 = vmatpush1.msra.mxu0 0.0
    %63 = vmatprep.subr.mxu0 0.0
    %64 = vmatpush1.msra.mxu0 0.0
    %65 = vmatprep.subr.mxu0 0.0
    %66 = vmatpush1.msra.mxu0 0.0
    %67 = vmatprep.subr.mxu0 0.0
    %68 = vmatpush1.msra.mxu0 0.0
    %69 = vmatprep.subr.mxu0 0.0
    %70 = vmatpush1.msra.mxu0 0.0
    %71 = vmatprep.subr.mxu0 0.0
    %72 = vmatpush1.msra.mxu0 0.0
    %73 = vmatprep.subr.mxu0 0.0
    %74 = vmatpush1.msra.mxu0 0.0
    %75 = vmatprep.subr.mxu0 0.0
    %76 = vmatpush1.msra.mxu0 0.0
    %77 = vmatprep.subr.mxu0 0.0
    %78 = vmatpush1.msra.mxu0 0.0
    %79 = vmatprep.subr.mxu0 0.0
    %80 = vmatpush1.msra.mxu0 0.0
    %81 = vmatprep.subr.mxu0 0.0
    %82 = vmatpush1.msra.mxu0 0.0
    %83 = vmatprep.subr.mxu0 0.0
    %84 = vmatpush1.msra.mxu0 0.0
    %85 = vmatprep.subr.mxu0 0.0
    %86 = vmatpush1.msra.mxu0 0.0
    %87 = vmatprep.subr.mxu0 0.0
    %88 = vmatpush1.msra.mxu0 0.0
    %89 = vmatprep.subr.mxu0 0.0
    %90 = vmatpush1.msra.mxu0 0.0
    %91 = vmatprep.subr.mxu0 0.0
    %92 = vmatpush1.msra.mxu0 0.0
    %93 = vmatprep.subr.mxu0 0.0
    %94 = vmatpush1.msra.mxu0 0.0
    %95 = vmatprep.mubr.f32.mxu0 0.0
    %96 = vmatmul.mubr.f32.gmra.mrb[0].mxu0 %v29
    %v97 = vpop.f32.mrb[0].mxu0
    %v98 = vadd.f32 %v25, %v97
    %v99 = vpop.f32.mrb[0].mxu0
    %100 = vdwg.mxu0
    %vm101 = vcmask 130048
    %102 = vst.msk [vmem:[#allocation2] sm:$0xff] %vm101, %v98
    // Predicated region
    $region14: #{linear_net_forward.1} parent=1 // pred_check
      _
    $region15: #{linear_net_forward.1} parent=1 // pred_check_branch
      %104 = sbr.rel (0) target = $region17
    $region16: #{linear_net_forward.1} parent=1 // pred_region
      %s106 = ssub.s32 128, 128
      %107 = vsyncadd [#allocation3], %s106
      %s109 = sshll.u32 [#allocation2], 4
      %s110 = int_to_ptr.vmem [resolvable:$true] %s109
      %112 = dma.vmem_to_hbm [thread:$0]  %s110, 128, %s3, [#allocation3]
    $region17: #{linear_net_forward.1} parent=1 // pred_fallthru
      _
    // Predicated region
    $region18: #{linear_net_forward.1} parent=1 // pred_check
      _
    $region19: #{linear_net_forward.1} parent=1 // pred_check_branch
      %114 = sbr.rel (0) target = $region21
    $region20: #{linear_net_forward.1} parent=1 // pred_region
      %115 = dma.done [#allocation3], 128
    $region21: #{linear_net_forward.1} parent=1 // pred_fallthru
      _
    %116 = vsyncpa [#allocation3], 1

</llo_original>
